<compile_context>
chip_gen: v6e
topology: v6e:2x2x1
jax: 0.10.0
libtpu: 0.0.40
codegen_flags: <defaults>
</compile_context>

<pallas_src>
import jax
import jax.numpy as jnp
from jax import lax
from jax.experimental import pallas as pl
from jax.experimental.pallas import tpu as pltpu


def _round_up(n: int, m: int) -> int:
    return ((n + m - 1) // m) * m


def pack_qnet_params(params, n_obs: int, n_act: int, hidden: int = 64):
    """Pack (w1, b1, w2, b2, w3, b3) into a single (Dp+H+8, H) f32 slab.

    Row layout (Dp = round_up(n_obs + n_act, 8)):
      [0, D)        : W1 rows (obs rows then act rows)
      [D, Dp)       : zero padding (keeps W2 slice sublane-aligned)
      [Dp, Dp+H)    : W2
      [Dp+H, Dp+H+8): row 0 = b1, row 1 = b2, row 2 = w3^T (as a row),
                      row 3 = b3 broadcast over lanes, rows 4..7 = 0 pad.
    Done once at init / param update -> amortized, not per forward call.
    """
    w1, b1, w2, b2, w3, b3 = params
    D, H = n_obs + n_act, hidden
    Dp = _round_up(D, 8)
    assert w1.shape == (D, H) and w2.shape == (H, H) and w3.shape == (H, 1)
    w1p = jnp.zeros((Dp, H), jnp.float32).at[:D].set(w1.astype(jnp.float32))
    vec = jnp.zeros((8, H), jnp.float32)
    vec = vec.at[0].set(jnp.reshape(b1, (H,)).astype(jnp.float32))
    vec = vec.at[1].set(jnp.reshape(b2, (H,)).astype(jnp.float32))
    vec = vec.at[2].set(jnp.reshape(w3, (H,)).astype(jnp.float32))
    vec = vec.at[3].set(jnp.full((H,), jnp.reshape(b3, ()), jnp.float32))
    return jnp.concatenate([w1p, w2.astype(jnp.float32), vec], axis=0)


def _choose_batch_tile(B: int, block_b: int, min_split: int = 256) -> int:
    """Pick the batch tile.

    * Big batches (> block_b rows): block_b-sized tiles (multiple of 128 ->
      lane-dense output blocks), many grid steps.
    * Medium batches (>= min_split): split into 2 lane-aligned tiles so the
      "parallel" grid axis has work for both v7x TensorCores.
    * Tiny batches: one full-array tile (grid of 1).
    """
    b8 = _round_up(B, 8)
    if b8 > block_b:
        return block_b
    if b8 >= min_split:
        return _round_up((b8 + 1) // 2, 128)
    return b8


def qnet_forward(obs, act, packed, *, block_b: int = 1024):
    """obs: (B, n_obs), act: (B, n_act), packed: (Dp+H+8, H). Returns q: (B, 1)."""
    assert block_b % 128 == 0 and block_b >= 128
    B, n_obs = obs.shape
    n_act = act.shape[1]
    H = packed.shape[1]
    D = n_obs + n_act
    Dp = _round_up(D, 8)
    R = Dp + H + 8
    assert packed.shape[0] == R, "packed slab has wrong row count"

    tb = _choose_batch_tile(B, block_b)
    Bp = _round_up(B, tb)
    if Bp != B:
        obs = jnp.pad(obs, ((0, Bp - B), (0, 0)))
        act = jnp.pad(act, ((0, Bp - B), (0, 0)))
    G = Bp // tb

    def kernel(obs_ref, act_ref, p_ref, out_ref):
        o = obs_ref[...]                                   # (tb, n_obs)
        a = act_ref[...]                                   # (tb, n_act)
        # Fused concat -> single K=Dp matmul (one MXU push instead of two).
        x = jnp.concatenate([o, a], axis=-1)               # (tb, D)
        if Dp != D:
            x = jnp.concatenate(
                [x, jnp.zeros((tb, Dp - D), x.dtype)], axis=-1)  # (tb, Dp)

        # Static slices of the VMEM-resident packed parameter slab.
        w1 = p_ref[0:Dp, :]                                # (Dp, H)
        w2 = p_ref[Dp:Dp + H, :]                           # (H, H)
        vec = p_ref[Dp + H:R, :]                           # (8, H)
        b1 = vec[0:1, :]                                   # (1, H)
        b2 = vec[1:2, :]                                   # (1, H)
        w3 = vec[2:3, :]                                   # (1, H) = W3^T row
        b3 = vec[3:4, 0:1]                                 # (1, 1)

        # l1: Linear + ReLU
        h1 = jnp.maximum(
            jnp.dot(x, w1, preferred_element_type=jnp.float32) + b1, 0.0)
        # l2: Linear + ReLU, residual add
        h2 = jnp.dot(h1, w2, preferred_element_type=jnp.float32) + b2
        h = h1 + jnp.maximum(h2, 0.0)                      # (tb, H)
        # l3: contract H between w3 (1,H) and h (tb,H) -> lane-dense (1, tb) row.
        q = lax.dot_general(w3, h, (((1,), (1,)), ((), ())),
                            preferred_element_type=jnp.float32)
        out_ref[...] = (q + b3).astype(out_ref.dtype)      # (1, tb)

    out = pl.pallas_call(
        kernel,
        out_shape=jax.ShapeDtypeStruct((G, tb), jnp.float32),
        grid=(G,),
        in_specs=[
            pl.BlockSpec((tb, n_obs), lambda i: (i, 0)),   # obs tile
            pl.BlockSpec((tb, n_act), lambda i: (i, 0)),   # act tile
            pl.BlockSpec((R, H), lambda i: (0, 0)),        # packed params (resident)
        ],
        out_specs=pl.BlockSpec((1, tb), lambda i: (i, 0)), # lane-dense q row
        compiler_params=pltpu.CompilerParams(
            dimension_semantics=("parallel",),             # v7x: shard over 2 TCs
            vmem_limit_bytes=32 * 1024 * 1024,             # explicit headroom, all gens
        ),
    )(obs, act, packed)
    return out.reshape(Bp)[:B].reshape(B, 1)


def init_qnet_params(key, n_obs, n_act, hidden=64):
    """PyTorch-default-like Linear init (U[-1/sqrt(fan_in), 1/sqrt(fan_in)])."""
    d_in = n_obs + n_act
    keys = jax.random.split(key, 6)

    def uniform(k, shape, fan_in):
        bound = 1.0 / jnp.sqrt(fan_in)
        return jax.random.uniform(k, shape, jnp.float32, -bound, bound)

    w1 = uniform(keys[0], (d_in, hidden), d_in)
    b1 = uniform(keys[1], (1, hidden), d_in)
    w2 = uniform(keys[2], (hidden, hidden), hidden)
    b2 = uniform(keys[3], (1, hidden), hidden)
    w3 = uniform(keys[4], (hidden, 1), hidden)
    b3 = uniform(keys[5], (1, 1), hidden)
    return (w1, b1, w2, b2, w3, b3)


def qnet_reference(obs, act, params):
    """Pure-JAX reference of the PyTorch forward for verification."""
    w1, b1, w2, b2, w3, b3 = params
    hp = lax.Precision.HIGHEST
    x = jnp.concatenate([obs, act], axis=1)
    h1 = jnp.maximum(jnp.dot(x, w1, precision=hp) + b1, 0.0)
    h = h1 + jnp.maximum(jnp.dot(h1, w2, precision=hp) + b2, 0.0)
    return jnp.dot(h, w3, precision=hp) + b3


if __name__ == "__main__":
    n_obs, n_act, hidden = 12, 4, 64
    key = jax.random.PRNGKey(0)
    k_obs, k_act, k_par, k_obs2, k_act2 = jax.random.split(key, 5)

    params = init_qnet_params(k_par, n_obs, n_act, hidden)
    packed = pack_qnet_params(params, n_obs, n_act, hidden)

    # Small case (B=8): single full-array tile, grid=(1,).
    B = 8
    obs = jax.random.normal(k_obs, (B, n_obs), jnp.float32)
    act = jax.random.normal(k_act, (B, n_act), jnp.float32)
    q = jax.block_until_ready(qnet_forward(obs, act, packed))
    q_ref = qnet_reference(obs, act, params)
    assert q.shape == (B, 1)
    assert jnp.allclose(q, q_ref, atol=1e-3, rtol=1e-3), "mismatch (B=8)"

    # Medium, non-multiple batch: exercises padding + the 2-step (dual-TC) path.
    B2 = 300
    obs2 = jax.random.normal(k_obs2, (B2, n_obs), jnp.float32)
    act2 = jax.random.normal(k_act2, (B2, n_act), jnp.float32)
    q2 = jax.block_until_ready(qnet_forward(obs2, act2, packed))
    q2_ref = qnet_reference(obs2, act2, params)
    assert q2.shape == (B2, 1)
    assert jnp.allclose(q2, q2_ref, atol=1e-3, rtol=1e-3), "mismatch (B=300)"

    # Larger batch: exercises big-tile multi-step pipelining.
    B3 = 2500
    obs3 = jax.random.normal(jax.random.PRNGKey(1), (B3, n_obs), jnp.float32)
    act3 = jax.random.normal(jax.random.PRNGKey(2), (B3, n_act), jnp.float32)
    q3 = jax.block_until_ready(qnet_forward(obs3, act3, packed, block_b=1024))
    q3_ref = qnet_reference(obs3, act3, params)
    assert q3.shape == (B3, 1)
    assert jnp.allclose(q3, q3_ref, atol=1e-3, rtol=1e-3), "mismatch (B=2500)"

    print("KERNEL_OK")
</pallas_src>

<mosaic_0001>
module attributes {stable_mosaic.version = 11 : i64} {
  func.func @kernel(%arg0: i32, %arg1: memref<8x12xf32, #tpu.memory_space<vmem>>, %arg2: memref<8x4xf32, #tpu.memory_space<vmem>>, %arg3: memref<88x64xf32, #tpu.memory_space<vmem>>, %arg4: memref<1x8xf32, #tpu.memory_space<vmem>>) attributes {dimension_semantics = [#tpu.dimension_semantics<parallel>], iteration_bounds = array<i64: 1>, scalar_prefetch = 0 : i64, scratch_operands = 0 : i64, tpu.core_type = #tpu.core_type<tc>, window_params = [{transform_indices = @transform_0, window_bounds = array<i64: 8, 12>}, {transform_indices = @transform_1, window_bounds = array<i64: 8, 4>}, {pipeline_mode = #tpu.pipeline_mode<synchronous>, transform_indices = @transform_2, window_bounds = array<i64: 88, 64>}, {transform_indices = @transform_3, window_bounds = array<i64: 1, 8>}]} {
    %c0 = arith.constant 0 : index
    %c0_0 = arith.constant 0 : index
    %0 = vector.load %arg1[%c0, %c0_0] : memref<8x12xf32, #tpu.memory_space<vmem>>, vector<8x12xf32>
    %c0_1 = arith.constant 0 : index
    %c0_2 = arith.constant 0 : index
    %1 = vector.load %arg2[%c0_1, %c0_2] : memref<8x4xf32, #tpu.memory_space<vmem>>, vector<8x4xf32>
    %2 = tpu.concatenate %0, %1 in 1 : vector<8x12xf32>, vector<8x4xf32> -> vector<8x16xf32>
    %c0_3 = arith.constant 0 : index
    %c0_4 = arith.constant 0 : index
    %3 = vector.load %arg3[%c0_3, %c0_4] : memref<88x64xf32, #tpu.memory_space<vmem>>, vector<16x64xf32>
    %c16 = arith.constant 16 : index
    %c0_5 = arith.constant 0 : index
    %4 = vector.load %arg3[%c16, %c0_5] : memref<88x64xf32, #tpu.memory_space<vmem>>, vector<64x64xf32>
    %c80 = arith.constant 80 : index
    %c0_6 = arith.constant 0 : index
    %5 = vector.load %arg3[%c80, %c0_6] : memref<88x64xf32, #tpu.memory_space<vmem>>, vector<8x64xf32>
    %6 = vector.extract_strided_slice %5 {offsets = [0, 0], sizes = [1, 64], strides = [1, 1]} : vector<8x64xf32> to vector<1x64xf32>
    %7 = vector.extract_strided_slice %5 {offsets = [1, 0], sizes = [1, 64], strides = [1, 1]} : vector<8x64xf32> to vector<1x64xf32>
    %8 = vector.extract_strided_slice %5 {offsets = [2, 0], sizes = [1, 64], strides = [1, 1]} : vector<8x64xf32> to vector<1x64xf32>
    %9 = vector.extract_strided_slice %5 {offsets = [3, 0], sizes = [1, 1], strides = [1, 1]} : vector<8x64xf32> to vector<1x1xf32>
    %cst = arith.constant dense<0.000000e+00> : vector<8x64xf32>
    %10 = tpu.matmul %2, %3, %cst {dimension_numbers = #tpu.dot_dimension_numbers<[1], [0], [0], [1], [0, 0, 1, 1], [], []>} : vector<8x16xf32>, vector<16x64xf32>, vector<8x64xf32> -> vector<8x64xf32>
    %11 = vector.broadcast %6 : vector<1x64xf32> to vector<8x64xf32>
    %12 = arith.addf %10, %11 : vector<8x64xf32>
    %cst_7 = arith.constant 0.000000e+00 : f32
    %13 = vector.broadcast %cst_7 : f32 to vector<8x64xf32>
    %14 = arith.maximumf %12, %13 : vector<8x64xf32>
    %cst_8 = arith.constant dense<0.000000e+00> : vector<8x64xf32>
    %15 = tpu.matmul %14, %4, %cst_8 {dimension_numbers = #tpu.dot_dimension_numbers<[1], [0], [0], [1], [0, 0, 1, 1], [], []>} : vector<8x64xf32>, vector<64x64xf32>, vector<8x64xf32> -> vector<8x64xf32>
    %16 = vector.broadcast %7 : vector<1x64xf32> to vector<8x64xf32>
    %17 = arith.addf %15, %16 : vector<8x64xf32>
    %cst_9 = arith.constant 0.000000e+00 : f32
    %18 = vector.broadcast %cst_9 : f32 to vector<8x64xf32>
    %19 = arith.maximumf %17, %18 : vector<8x64xf32>
    %20 = arith.addf %14, %19 : vector<8x64xf32>
    %cst_10 = arith.constant dense<0.000000e+00> : vector<1x8xf32>
    %21 = tpu.matmul %8, %20, %cst_10 {dimension_numbers = #tpu.dot_dimension_numbers<[1], [1], [0], [0], [0, 0, 1, 0], [], []>} : vector<1x64xf32>, vector<8x64xf32>, vector<1x8xf32> -> vector<1x8xf32>
    %22 = vector.broadcast %9 : vector<1x1xf32> to vector<1x8xf32>
    %23 = arith.addf %21, %22 : vector<1x8xf32>
    %c0_11 = arith.constant 0 : index
    %c0_12 = arith.constant 0 : index
    %24 = vector.load %arg4[%c0_11, %c0_12] : memref<1x8xf32, #tpu.memory_space<vmem>>, vector<1x8xf32>
    tpu.vector_store %arg4[%c0_11, %c0_12], %23 {strides = array<i32>} : memref<1x8xf32, #tpu.memory_space<vmem>>, vector<1x8xf32>,
    return
  }
  func.func @transform_0(%arg0: i32) -> (i32, i32) {
    %c0_i32 = arith.constant 0 : i32
    %c0_i32_0 = arith.constant 0 : i32
    return %arg0, %c0_i32 : i32, i32
  }
  func.func @transform_1(%arg0: i32) -> (i32, i32) {
    %c0_i32 = arith.constant 0 : i32
    %c0_i32_0 = arith.constant 0 : i32
    return %arg0, %c0_i32 : i32, i32
  }
  func.func @transform_2(%arg0: i32) -> (i32, i32) {
    %c0_i32 = arith.constant 0 : i32
    %c0_i32_0 = arith.constant 0 : i32
    %c0_i32_1 = arith.constant 0 : i32
    return %c0_i32, %c0_i32_0 : i32, i32
  }
  func.func @transform_3(%arg0: i32) -> (i32, i32) {
    %c0_i32 = arith.constant 0 : i32
    %c0_i32_0 = arith.constant 0 : i32
    return %arg0, %c0_i32 : i32, i32
  }
}

</mosaic_0001>

<llo_original>
// kernel: tpu_custom_call.1
$region0: #{tpu_custom_call.1}
  #allocation0 [shape = 'u32[]', space=smem, size = 0x4, offset = 0x4, fixed_abs, tag = 'smem constant byte address 0x4 - core index']
  #allocation1 [shape = 'u32[144,128]{1,0:T(1,128)}', space=vmem, size = 0x12000, scoped, tag = 'internal scratch']
  %s0 = inlined_call_operand.vmem [shape: f32[8,12], index: 0, kind: input, shape index: {}]
  %s1 = inlined_call_operand.vmem [shape: f32[8,4], index: 1, kind: input, shape index: {}]
  %s2 = inlined_call_operand.vmem [shape: f32[88,64], index: 2, kind: input, shape index: {}]
  %s3 = inlined_call_operand.hbm [shape: f32[1,8], index: 3, kind: output, shape index: {}]
  %s4 = sld [smem:[#allocation0]]
  $region22: #{tpu_custom_call.1} parent=0
    _
  %s6 = ssub.s32 1, %s4
  %s7 = scalar_select 0, %s6, %s4
  $region1: #{tpu_custom_call.1} parent=0
    #allocation2 [shape = 'u8[512]{0}', space=vmem, size = 0x400, scoped, tag = 'output window, operand 0, single buffered']
    #allocation3 [shape = 's32[1]{0}', space=sflag, size = 0x4, scoped, tag = 'scoped memory for tpu_custom_call.1']
    %8 = vsyncpa [#allocation3], 0
    // Predicated region
    $region2: #{tpu_custom_call.1} parent=1 // pred_check
      _
    $region3: #{tpu_custom_call.1} parent=1 // pred_check_branch
      %10 = sbr.rel (0) target = $region5
    $region4: #{tpu_custom_call.1} parent=1 // pred_region
      _
    $region5: #{tpu_custom_call.1} parent=1 // pred_fallthru
      _
    // Predicated region
    $region6: #{tpu_custom_call.1} parent=1 // pred_check
      _
    $region7: #{tpu_custom_call.1} parent=1 // pred_check_branch
      %12 = sbr.rel (0) target = $region9
    $region8: #{tpu_custom_call.1} parent=1 // pred_region
      _
    $region9: #{tpu_custom_call.1} parent=1 // pred_fallthru
      _
    // Predicated region
    $region10: #{tpu_custom_call.1} parent=1 // pred_check
      _
    $region11: #{tpu_custom_call.1} parent=1 // pred_check_branch
      %14 = sbr.rel (0) target = $region13
    $region12: #{tpu_custom_call.1} parent=1 // pred_region
      _
    $region13: #{tpu_custom_call.1} parent=1 // pred_fallthru
      _
    %v15 = vld [vmem:[%s0] sm:$0xff]
    %v16 = vld [vmem:[%s1] sm:$0xff]
    %18 = vrot.lane.b32.xlu0 %v16, 12
    %v19 = vpop.permute.xlu0 %18
    %vm21 = vcmask 97280
    %v22 = vsel %vm21, %v15, %v19
    %v23 = vld [vmem:[%s2] sm:$0xff]
    %v24 = vld [vmem:[%s2 + $0x8] sm:$0xff]
    %v25 = vld [vmem:[%s2 + $0x10] sm:$0xff]
    %v26 = vld [vmem:[%s2 + $0x18] sm:$0xff]
    %v27 = vld [vmem:[%s2 + $0x20] sm:$0xff]
    %v28 = vld [vmem:[%s2 + $0x28] sm:$0xff]
    %v29 = vld [vmem:[%s2 + $0x30] sm:$0xff]
    %v30 = vld [vmem:[%s2 + $0x38] sm:$0xff]
    %v31 = vld [vmem:[%s2 + $0x40] sm:$0xff]
    %v32 = vld [vmem:[%s2 + $0x48] sm:$0xff]
    %v33 = vld [vmem:[%s2 + $0x50] sm:$0xff]
    %v34 = vlaneseq
    %v35 = vshrl.u32 %v34, 7
    %v36 = vsub.s32 0, %v35
    %v37 = vrot.slane %v33, %v36
    %vm38 = vcmask 130048
    %v40 = vsel %vm38, %v22, 0
    %42 = vmatprep.subr.mxu0 0.0
    %43 = vmatpush1.msra.mxu0 0.0
    %44 = vmatprep.subr.mxu0 0.0
    %45 = vmatpush1.msra.mxu0 0.0
    %46 = vmatprep.subr.mxu0 0.0
    %47 = vmatpush1.msra.mxu0 0.0
    %48 = vmatprep.subr.mxu0 0.0
    %49 = vmatpush1.msra.mxu0 0.0
    %50 = vmatprep.subr.mxu0 0.0
    %51 = vmatpush1.msra.mxu0 0.0
    %52 = vmatprep.subr.mxu0 0.0
    %53 = vmatpush1.msra.mxu0 0.0
    %54 = vmatprep.subr.mxu0 0.0
    %55 = vmatpush1.msra.mxu0 0.0
    %56 = vmatprep.subr.mxu0 0.0
    %57 = vmatpush1.msra.mxu0 0.0
    %58 = vmatprep.subr.mxu0 0.0
    %59 = vmatpush1.msra.mxu0 0.0
    %60 = vmatprep.subr.mxu0 0.0
    %61 = vmatpush1.msra.mxu0 0.0
    %62 = vmatprep.subr.mxu0 0.0
    %63 = vmatpush1.msra.mxu0 0.0
    %64 = vmatprep.subr.mxu0 0.0
    %65 = vmatpush1.msra.mxu0 0.0
    %66 = vmatprep.subr.mxu0 0.0
    %67 = vmatpush1.msra.mxu0 0.0
    %68 = vmatprep.subr.mxu0 0.0
    %69 = vmatpush1.msra.mxu0 0.0
    %70 = vmatprep.subr.mxu0 0.0
    %71 = vmatpush1.msra.mxu0 %v24
    %72 = vmatprep.subr.mxu0 0.0
    %73 = vmatpush1.msra.mxu0 %v23
    %74 = vmatprep.subr.mxu0 0.0
    %75 = vmatpush2.msra.mxu0 0.0
    %76 = vmatprep.subr.mxu0 0.0
    %77 = vmatpush2.msra.mxu0 0.0
    %78 = vmatprep.subr.mxu0 0.0
    %79 = vmatpush2.msra.mxu0 0.0
    %80 = vmatprep.subr.mxu0 0.0
    %81 = vmatpush2.msra.mxu0 0.0
    %82 = vmatprep.subr.mxu0 0.0
    %83 = vmatpush2.msra.mxu0 0.0
    %84 = vmatprep.subr.mxu0 0.0
    %85 = vmatpush2.msra.mxu0 0.0
    %86 = vmatprep.subr.mxu0 0.0
    %87 = vmatpush2.msra.mxu0 0.0
    %88 = vmatprep.subr.mxu0 0.0
    %89 = vmatpush2.msra.mxu0 0.0
    %90 = vmatprep.subr.mxu0 0.0
    %91 = vmatpush2.msra.mxu0 0.0
    %92 = vmatprep.subr.mxu0 0.0
    %93 = vmatpush2.msra.mxu0 0.0
    %94 = vmatprep.subr.mxu0 0.0
    %95 = vmatpush2.msra.mxu0 0.0
    %96 = vmatprep.subr.mxu0 0.0
    %97 = vmatpush2.msra.mxu0 0.0
    %98 = vmatprep.subr.mxu0 0.0
    %99 = vmatpush2.msra.mxu0 0.0
    %100 = vmatprep.subr.mxu0 0.0
    %101 = vmatpush2.msra.mxu0 0.0
    %102 = vmatprep.subr.mxu0 0.0
    %103 = vmatpush2.msra.mxu0 0.0
    %104 = vmatprep.subr.mxu0 0.0
    %105 = vmatpush2.msra.mxu0 0.0
    %106 = vmatprep.mubr.f32.mxu0 0.0
    %107 = vmatmul.mubr.f32.gmra.mxu0 %v40
    %v108 = vpop.f32.mrf.mxu0
    %v109 = vadd.f32 %v37, %v108
    %v110 = vpop.f32.mrf.mxu0
    %111 = vdwg.mxu0
    %v112 = vmax.f32 %v109, 0.0
    %v113 = vlaneseq
    %v114 = vshrl.u32 %v113, 7
    %v115 = vsub.s32 1, %v114
    %v116 = vrot.slane %v33, %v115
    %vm117 = vcmask 523264
    %v119 = vsel %vm117, %v112, 0
    %121 = vmatprep.subr.mxu0 0.0
    %122 = vmatpush1.msra.mxu0 0.0
    %123 = vmatprep.subr.mxu0 0.0
    %124 = vmatpush1.msra.mxu0 0.0
    %125 = vmatprep.subr.mxu0 0.0
    %126 = vmatpush1.msra.mxu0 0.0
    %127 = vmatprep.subr.mxu0 0.0
    %128 = vmatpush1.msra.mxu0 0.0
    %129 = vmatprep.subr.mxu0 0.0
    %130 = vmatpush1.msra.mxu0 0.0
    %131 = vmatprep.subr.mxu0 0.0
    %132 = vmatpush1.msra.mxu0 0.0
    %133 = vmatprep.subr.mxu0 0.0
    %134 = vmatpush1.msra.mxu0 0.0
    %135 = vmatprep.subr.mxu0 0.0
    %136 = vmatpush1.msra.mxu0 0.0
    %137 = vmatprep.subr.mxu0 0.0
    %138 = vmatpush1.msra.mxu0 %v32
    %139 = vmatprep.subr.mxu0 0.0
    %140 = vmatpush1.msra.mxu0 %v31
    %141 = vmatprep.subr.mxu0 0.0
    %142 = vmatpush1.msra.mxu0 %v30
    %143 = vmatprep.subr.mxu0 0.0
    %144 = vmatpush1.msra.mxu0 %v29
    %145 = vmatprep.subr.mxu0 0.0
    %146 = vmatpush1.msra.mxu0 %v28
    %147 = vmatprep.subr.mxu0 0.0
    %148 = vmatpush1.msra.mxu0 %v27
    %149 = vmatprep.subr.mxu0 0.0
    %150 = vmatpush1.msra.mxu0 %v26
    %151 = vmatprep.subr.mxu0 0.0
    %152 = vmatpush1.msra.mxu0 %v25
    %153 = vmatprep.subr.mxu0 0.0
    %154 = vmatpush2.msra.mxu0 0.0
    %155 = vmatprep.subr.mxu0 0.0
    %156 = vmatpush2.msra.mxu0 0.0
    %157 = vmatprep.subr.mxu0 0.0
    %158 = vmatpush2.msra.mxu0 0.0
    %159 = vmatprep.subr.mxu0 0.0
    %160 = vmatpush2.msra.mxu0 0.0
    %161 = vmatprep.subr.mxu0 0.0
    %162 = vmatpush2.msra.mxu0 0.0
    %163 = vmatprep.subr.mxu0 0.0
    %164 = vmatpush2.msra.mxu0 0.0
    %165 = vmatprep.subr.mxu0 0.0
    %166 = vmatpush2.msra.mxu0 0.0
    %167 = vmatprep.subr.mxu0 0.0
    %168 = vmatpush2.msra.mxu0 0.0
    %169 = vmatprep.subr.mxu0 0.0
    %170 = vmatpush2.msra.mxu0 0.0
    %171 = vmatprep.subr.mxu0 0.0
    %172 = vmatpush2.msra.mxu0 0.0
    %173 = vmatprep.subr.mxu0 0.0
    %174 = vmatpush2.msra.mxu0 0.0
    %175 = vmatprep.subr.mxu0 0.0
    %176 = vmatpush2.msra.mxu0 0.0
    %177 = vmatprep.subr.mxu0 0.0
    %178 = vmatpush2.msra.mxu0 0.0
    %179 = vmatprep.subr.mxu0 0.0
    %180 = vmatpush2.msra.mxu0 0.0
    %181 = vmatprep.subr.mxu0 0.0
    %182 = vmatpush2.msra.mxu0 0.0
    %183 = vmatprep.subr.mxu0 0.0
    %184 = vmatpush2.msra.mxu0 0.0
    %185 = vmatprep.mubr.f32.mxu0 0.0
    %186 = vmatmul.mubr.f32.gmra.mxu0 %v119
    %v187 = vpop.f32.mrf.mxu0
    %v188 = vadd.f32 %v116, %v187
    %v189 = vpop.f32.mrf.mxu0
    %190 = vdwg.mxu0
    %v191 = vmax.f32 %v188, 0.0
    %v192 = vadd.f32 %v112, %v191
    %194 = vset.pattern.permute.xlu0 0
    %195 = vperm.xlu0 %194, %v33
    %v196 = vpop.permute.xlu0 %195
    %v197 = vrot.slane %v33, 2
    %v198 = vrot.slane %v196, 3
    %v200 = vsel %vm117, %v197, 0
    %v203 = vsel %vm117, %v192, 0
    %205 = vmatprep.subr.mxu0 0.0
    %206 = vmatpush1.xpose.msra.mxu0 0.0
    %207 = vmatprep.subr.mxu0 0.0
    %208 = vmatpush1.xpose.msra.mxu0 0.0
    %209 = vmatprep.subr.mxu0 0.0
    %210 = vmatpush1.xpose.msra.mxu0 0.0
    %211 = vmatprep.subr.mxu0 0.0
    %212 = vmatpush1.xpose.msra.mxu0 0.0
    %213 = vmatprep.subr.mxu0 0.0
    %214 = vmatpush1.xpose.msra.mxu0 0.0
    %215 = vmatprep.subr.mxu0 0.0
    %216 = vmatpush1.xpose.msra.mxu0 0.0
    %217 = vmatprep.subr.mxu0 0.0
    %218 = vmatpush1.xpose.msra.mxu0 0.0
    %219 = vmatprep.subr.mxu0 0.0
    %220 = vmatpush1.xpose.msra.mxu0 0.0
    %221 = vmatprep.subr.mxu0 0.0
    %222 = vmatpush1.xpose.msra.mxu0 0.0
    %223 = vmatprep.subr.mxu0 0.0
    %224 = vmatpush1.xpose.msra.mxu0 0.0
    %225 = vmatprep.subr.mxu0 0.0
    %226 = vmatpush1.xpose.msra.mxu0 0.0
    %227 = vmatprep.subr.mxu0 0.0
    %228 = vmatpush1.xpose.msra.mxu0 0.0
    %229 = vmatprep.subr.mxu0 0.0
    %230 = vmatpush1.xpose.msra.mxu0 0.0
    %231 = vmatprep.subr.mxu0 0.0
    %232 = vmatpush1.xpose.msra.mxu0 0.0
    %233 = vmatprep.subr.mxu0 0.0
    %234 = vmatpush1.xpose.msra.mxu0 0.0
    %235 = vmatprep.subr.mxu0 0.0
    %236 = vmatpush1.xpose.msra.mxu0 %v203
    %237 = vmatprep.subr.mxu0 0.0
    %238 = vmatpush2.xpose.msra.mxu0 0.0
    %239 = vmatprep.subr.mxu0 0.0
    %240 = vmatpush2.xpose.msra.mxu0 0.0
    %241 = vmatprep.subr.mxu0 0.0
    %242 = vmatpush2.xpose.msra.mxu0 0.0
    %243 = vmatprep.subr.mxu0 0.0
    %244 = vmatpush2.xpose.msra.mxu0 0.0
    %245 = vmatprep.subr.mxu0 0.0
    %246 = vmatpush2.xpose.msra.mxu0 0.0
    %247 = vmatprep.subr.mxu0 0.0
    %248 = vmatpush2.xpose.msra.mxu0 0.0
    %249 = vmatprep.subr.mxu0 0.0
    %250 = vmatpush2.xpose.msra.mxu0 0.0
    %251 = vmatprep.subr.mxu0 0.0
    %252 = vmatpush2.xpose.msra.mxu0 0.0
    %253 = vmatprep.subr.mxu0 0.0
    %254 = vmatpush2.xpose.msra.mxu0 0.0
    %255 = vmatprep.subr.mxu0 0.0
    %256 = vmatpush2.xpose.msra.mxu0 0.0
    %257 = vmatprep.subr.mxu0 0.0
    %258 = vmatpush2.xpose.msra.mxu0 0.0
    %259 = vmatprep.subr.mxu0 0.0
    %260 = vmatpush2.xpose.msra.mxu0 0.0
    %261 = vmatprep.subr.mxu0 0.0
    %262 = vmatpush2.xpose.msra.mxu0 0.0
    %263 = vmatprep.subr.mxu0 0.0
    %264 = vmatpush2.xpose.msra.mxu0 0.0
    %265 = vmatprep.subr.mxu0 0.0
    %266 = vmatpush2.xpose.msra.mxu0 0.0
    %267 = vmatprep.subr.mxu0 0.0
    %268 = vmatpush2.xpose.msra.mxu0 0.0
    %269 = vmatprep.mubr.f32.mxu0 0.0
    %270 = vmatmul.mubr.f32.gmra.mxu0 %v200
    %v271 = vpop.f32.mrf.mxu0
    %v272 = vadd.f32 %v198, %v271
    %v273 = vpop.f32.mrf.mxu0
    %274 = vdwg.mxu0
    %vm275 = vcmask 57344
    %276 = vst.msk [vmem:[#allocation2] sm:$0x1] %vm275, %v272
    // Predicated region
    $region14: #{tpu_custom_call.1} parent=1 // pred_check
      _
    $region15: #{tpu_custom_call.1} parent=1 // pred_check_branch
      %278 = sbr.rel (0) target = $region17
    $region16: #{tpu_custom_call.1} parent=1 // pred_region
      %s280 = ssub.s32 16, 16
      %281 = vsyncadd [#allocation3], %s280
      %s283 = sshll.u32 [#allocation2], 4
      %s284 = int_to_ptr.vmem [resolvable:$true] %s283
      %286 = dma.vmem_to_hbm [thread:$0]  %s284, 16, %s3, [#allocation3]
    $region17: #{tpu_custom_call.1} parent=1 // pred_fallthru
      _
    // Predicated region
    $region18: #{tpu_custom_call.1} parent=1 // pred_check
      _
    $region19: #{tpu_custom_call.1} parent=1 // pred_check_branch
      %288 = sbr.rel (0) target = $region21
    $region20: #{tpu_custom_call.1} parent=1 // pred_region
      %289 = dma.done [#allocation3], 16
    $region21: #{tpu_custom_call.1} parent=1 // pred_fallthru
      _
    %290 = vsyncpa [#allocation3], 1

</llo_original>
